<compile_context>
chip_gen: v6e
topology: v6e:2x2x1
jax: 0.10.0
libtpu: 0.0.40
codegen_flags: <defaults>
</compile_context>

<pallas_src>
import math
import functools

import jax
import jax.numpy as jnp
from jax.experimental import pallas as pl
from jax.experimental.pallas import tpu as pltpu  # noqa: F401  (kept for TPU-specific tuning hooks)


# ---------------------------------------------------------------------------
# Problem sizes (small, consistent with the module's forward).
# ---------------------------------------------------------------------------
B = 2            # batch
IMG = 32         # input spatial size (NCHW: (B, 3, 32, 32))
C_VIS = 64       # visual backbone output channels (v_proj dim)
D = 128          # CLIP embedding dim (c_proj / text projection output)
HW = 64          # dense tokens after backbone (8 x 8)
NCLS = 8         # number of classes
NCTX = 4         # learned context tokens
CTXD = 128       # text transformer width (== ln_final width)
L = 16           # tokenized prompt length
LANE = 128       # TPU lane width (padded logits slab)

MODE = "pos200"   # cfg.MODE
USE_BIAS = False  # cfg.TRAINER.Caption.USE_BIAS

# Fixed (parameter-initialised) temperatures from the module __init__.
LOGIT_SCALE_POS = math.exp(3.0)   # temperature_pos.exp()
LOGIT_SCALE_NEG = math.exp(3.0)   # temperature_neg.exp()
SPATIAL_T_EXP = math.exp(3.0)     # prompt_learner.spatial_T.exp()


# ---------------------------------------------------------------------------
# Fused Pallas kernel: projection + normalization + similarities + pos200
# reweighting + spatial-softmax aggregation + pos-neg differences.
#   Inputs (all whole-array VMEM blocks, grid-less):
#     x      (B*HW, C_VIS)  bf16  dense backbone tokens (batch-major rows)
#     w_f    (C_VIS, D)     bf16  fused projection weight  (= Wv.T @ Wc.T)
#     b_f    (1, D)         f32   fused projection bias    (= bv @ Wc.T + bc)
#     t_T    (D, 3*NCLS)    bf16  [tf; tfp; tfn].T  (L2-normalized text feats)
#     g      (B, D)         f32   attention-pooled global image feature
#   Outputs:
#     out    (2B, 128)      f32   rows [0:B)=logits_, [B:2B)=logits_g (lane-padded)
#     feat   (B, HW, D)     f32   L2-normalized dense image features
# ---------------------------------------------------------------------------
def fused_dense_kernel(x_ref, wf_ref, bf_ref, tT_ref, g_ref, out_ref, feat_ref):
    # Fused affine projection (v_proj then c_proj): bf16 MXU, f32 accumulation.
    proj = jnp.dot(x_ref[...], wf_ref[...],
                   preferred_element_type=jnp.float32) + bf_ref[...]        # (B*HW, D)

    # Per-token L2 normalization (f32).
    xn = proj * jax.lax.rsqrt(jnp.sum(proj * proj, axis=-1, keepdims=True))
    feat_ref[...] = xn.reshape(B, HW, D)

    # Normalize the global (attention-pooled) feature.
    g = g_ref[...]
    gn = g * jax.lax.rsqrt(jnp.sum(g * g, axis=-1, keepdims=True))          # (B, D)

    # One lane-merged similarity matmul against the pre-transposed text matrix.
    tT = tT_ref[...]                                                        # (D, 3*NCLS)
    sims = jnp.dot(xn.astype(tT.dtype), tT,
                   preferred_element_type=jnp.float32)                      # (B*HW, 3*NCLS)
    gsims = jnp.dot(gn.astype(tT.dtype), tT,
                    preferred_element_type=jnp.float32)                     # (B, 3*NCLS)

    logits = sims[:, 0:NCLS]            # image_features @ tf.T
    map_pos = sims[:, NCLS:2 * NCLS]    # image_features @ tfp.T
    sim_neg = sims[:, 2 * NCLS:3 * NCLS]

    logits_pos = LOGIT_SCALE_POS * map_pos
    logits_neg = LOGIT_SCALE_NEG * sim_neg

    # MODE == 'pos200': w_pos = 1 + softmax(map_pos * 200 * max_cls(map_pos), dim=cls)
    m = jnp.max(map_pos, axis=-1, keepdims=True)
    s = map_pos * 200.0 * m
    s = s - jnp.max(s, axis=-1, keepdims=True)
    e = jnp.exp(s)
    w_pos = 1.0 + e * pl.reciprocal(jnp.sum(e, axis=-1, keepdims=True), approx=True)
    logits_pos = logits_pos * w_pos

    # sum(pos*prob) - sum(neg*prob) == sum((pos-neg)*prob)
    diff = logits_pos - logits_neg                                          # (B*HW, NCLS)

    # Spatial softmax over HW per batch element + aggregation.  B is tiny and
    # static, so the Python loop is unrolled at trace time (tile-aligned
    # sublane slices at multiples of 8).
    rows = []
    for bi in range(B):
        lg = logits[bi * HW:(bi + 1) * HW]                                  # (HW, NCLS)
        df = diff[bi * HW:(bi + 1) * HW]
        z = lg * SPATIAL_T_EXP
        z = z - jnp.max(z, axis=0, keepdims=True)
        ez = jnp.exp(z)
        prob = ez * pl.reciprocal(jnp.sum(ez, axis=0, keepdims=True), approx=True)
        rows.append(jnp.sum(df * prob, axis=0, keepdims=True))              # (1, NCLS)
    logits_ = jnp.concatenate(rows, axis=0)                                 # (B, NCLS)

    # Global logits: pos_g - neg_g.
    logits_g = (LOGIT_SCALE_POS * gsims[:, NCLS:2 * NCLS]
                - LOGIT_SCALE_NEG * gsims[:, 2 * NCLS:3 * NCLS])            # (B, NCLS)

    # Lane-dense stacked output slab (unmasked 128-wide stores).
    stacked = jnp.concatenate([logits_, logits_g], axis=0)                  # (2B, NCLS)
    pad = jnp.zeros((2 * B, LANE - NCLS), jnp.float32)
    out_ref[...] = jnp.concatenate([stacked, pad], axis=1)                  # (2B, 128)


def run_fused_dense(x_flat, w_fused, b_fused, t_all_T, img_global):
    out_shapes = (
        jax.ShapeDtypeStruct((2 * B, LANE), jnp.float32),   # [logits_; logits_g] padded
        jax.ShapeDtypeStruct((B, HW, D), jnp.float32),      # normalized dense features
    )
    # Grid-less call: every operand is a single whole-array VMEM block
    # (total footprint ~100 KiB, far below any generation's VMEM budget).
    return pl.pallas_call(fused_dense_kernel, out_shape=out_shapes)(
        x_flat.astype(jnp.bfloat16),
        w_fused.astype(jnp.bfloat16),
        b_fused.reshape(1, D).astype(jnp.float32),
        t_all_T.astype(jnp.bfloat16),
        img_global.astype(jnp.float32),
    )


# ---------------------------------------------------------------------------
# Plain-JAX glue: synthetic CLIP backbone / attnpool / text encoder / prompts.
# ---------------------------------------------------------------------------
def conv2d(x, w, stride=1, padding=1):
    return jax.lax.conv_general_dilated(
        x, w, (stride, stride), [(padding, padding), (padding, padding)],
        dimension_numbers=("NCHW", "OIHW", "NCHW"))


def batchnorm(x, g, b, mean, var, eps=1e-5):
    inv = jax.lax.rsqrt(var + eps)
    return g[None, :, None, None] * (x - mean[None, :, None, None]) * inv[None, :, None, None] \
        + b[None, :, None, None]


def avgpool2(x):
    n, c, h, w = x.shape
    return x.reshape(n, c, h // 2, 2, w // 2, 2).mean(axis=(3, 5))


def layernorm(x, g, b, eps=1e-5):
    mu = x.mean(axis=-1, keepdims=True)
    var = ((x - mu) ** 2).mean(axis=-1, keepdims=True)
    return (x - mu) * jax.lax.rsqrt(var + eps) * g + b


def encode_image(p, image):
    # TODO(synk): CLIP's ModifiedResNet Bottleneck layers are approximated with
    # 1x1 conv + relu blocks (backbone belongs to clip_model, not DenseCLIP).
    x = image.astype(jnp.float32)
    for i in range(3):
        stride = 2 if i == 0 else 1
        x = conv2d(x, p[f"stem_w{i}"], stride=stride, padding=1)
        x = batchnorm(x, p[f"stem_bn_g{i}"], p[f"stem_bn_b{i}"],
                      p[f"stem_bn_m{i}"], p[f"stem_bn_v{i}"])
        x = jax.nn.relu(x)
    x = avgpool2(x)
    for i in range(4):
        x = conv2d(x, p[f"layer_w{i}"], stride=1, padding=0)
        x = jax.nn.relu(x)
    return x   # (B, C_VIS, 8, 8)


def attnpool(p, feat):
    # CLIP AttentionPool2d with if_pos=False (no positional embedding added),
    # single head; v_proj / c_proj weights are the ones shared with the dense path.
    b, c, h, w = feat.shape
    x = feat.reshape(b, c, h * w).transpose(2, 0, 1)                     # (HW, B, C)
    x = jnp.concatenate([x.mean(axis=0, keepdims=True), x], axis=0)      # (HW+1, B, C)
    q = x[:1] @ p["ap_q_w"].T + p["ap_q_b"]
    k = x @ p["ap_k_w"].T + p["ap_k_b"]
    v = x @ p["v_w"].T + p["v_b"]
    scores = jnp.einsum("qbc,kbc->bqk", q, k) / math.sqrt(c)
    attn = jax.nn.softmax(scores, axis=-1)
    out = jnp.einsum("bqk,kbc->qbc", attn, v)
    out = out @ p["c_w"].T + p["c_b"]                                    # (1, B, D)
    return out[0]                                                        # (B, D)


def prompt_learner(p):
    # class_token_position == 'end', neg_prompt_wcls == True
    prefix = p["token_prefix"]                     # (NCLS, 1, CTXD)
    suffix = p["token_suffix"]                     # (NCLS, L-1-NCTX, CTXD)
    def expand(ctx):
        return jnp.broadcast_to(ctx[None], (NCLS, NCTX, CTXD))
    prompts = jnp.concatenate([prefix, expand(p["ctx"]), suffix], axis=1)
    prompts_pos = jnp.concatenate([prefix, expand(p["ctx_pos"]), suffix], axis=1)
    prompts_neg = jnp.concatenate([prefix, expand(p["ctx_neg"]), suffix], axis=1)
    return prompts, prompts_pos, prompts_neg


def text_encoder(p, prompts, tokenized):
    # TODO(synk): the full CLIP text transformer is approximated with a single
    # pre-LN causal attention + MLP block (the transformer belongs to clip_model).
    x = prompts + p["pos_emb"]                     # (NCLS, L, CTXD)
    x = x.transpose(1, 0, 2)                       # (L, NCLS, CTXD)

    h = layernorm(x, p["t_ln1_g"], p["t_ln1_b"])
    q = h @ p["t_wq"]; k = h @ p["t_wk"]; v = h @ p["t_wv"]
    scores = jnp.einsum("qbw,kbw->bqk", q, k) / math.sqrt(CTXD)
    mask = jnp.tril(jnp.ones((L, L), jnp.bool_))
    scores = jnp.where(mask[None], scores, -1e9)
    attn = jax.nn.softmax(scores, axis=-1)
    x = x + jnp.einsum("bqk,kbw->qbw", attn, v) @ p["t_wo"]

    h = layernorm(x, p["t_ln2_g"], p["t_ln2_b"])
    x = x + jax.nn.gelu(h @ p["t_w1"]) @ p["t_w2"]

    x = x.transpose(1, 0, 2)                       # (NCLS, L, CTXD)
    x = layernorm(x, p["lnf_g"], p["lnf_b"])
    eot = jnp.argmax(tokenized, axis=-1)
    x = x[jnp.arange(NCLS), eot] @ p["text_proj"]  # (NCLS, D)
    return x


# ---------------------------------------------------------------------------
# Full DenseCLIP forward.
# ---------------------------------------------------------------------------
def denseclip_forward(p, image):
    image_feat = encode_image(p, image)                         # (B, C_VIS, 8, 8)
    b, c, h, w = image_feat.shape

    # Batch-major flattening of the dense tokens for the fused kernel.
    x_flat = image_feat.reshape(b, c, h * w).transpose(0, 2, 1).reshape(b * h * w, c)

    # Algebraic composition of the two F.linear projections (exact; recomputed
    # from the current weights every call, so it stays valid under training).
    w_fused = p["v_w"].T @ p["c_w"].T                           # (C_VIS, D)
    b_fused = p["v_b"] @ p["c_w"].T + p["c_b"]                  # (D,)

    image_feature_ = attnpool(p, image_feat)                    # (B, D)

    prompts, prompts_pos, prompts_neg = prompt_learner(p)
    text_features = text_encoder(p, prompts, p["tokenized"])
    text_features_pos = text_encoder(p, prompts_pos, p["tokenized"])
    text_features_neg = text_encoder(p, prompts_neg, p["tokenized"])

    def l2n(v):
        return v / jnp.linalg.norm(v, axis=-1, keepdims=True)
    tf = l2n(text_features)
    tfp = l2n(text_features_pos)
    tfn = l2n(text_features_neg)

    # Pre-transposed, lane-merged text matrix for one similarity matmul.
    t_all_T = jnp.concatenate([tf, tfp, tfn], axis=0).T         # (D, 3*NCLS)

    # Single fused Pallas kernel (projection + all dense-logit compute).
    slab, feat_b = run_fused_dense(x_flat, w_fused, b_fused, t_all_T, image_feature_)

    logits_ = slab[:B, :NCLS]                                   # (B, NCLS)
    logits_g = slab[B:2 * B, :NCLS]                             # (B, NCLS)
    image_features_out = jnp.transpose(feat_b, (1, 0, 2))       # (HW, B, D) normalized
    # USE_BIAS is False -> no bias added to logits_.
    return logits_g, logits_, image_features_out, tf


# ---------------------------------------------------------------------------
# Deterministic synthetic parameter init.
# ---------------------------------------------------------------------------
def init_params(key):
    ks = iter(jax.random.split(key, 64))
    nrm = lambda shape, s=0.02: jax.random.normal(next(ks), shape, jnp.float32) * s
    p = {}
    # stem convs
    chans = [(3, 16), (16, 16), (16, 32)]
    for i, (cin, cout) in enumerate(chans):
        p[f"stem_w{i}"] = nrm((cout, cin, 3, 3), 0.1)
        p[f"stem_bn_g{i}"] = jnp.ones((cout,), jnp.float32)
        p[f"stem_bn_b{i}"] = jnp.zeros((cout,), jnp.float32)
        p[f"stem_bn_m{i}"] = jnp.zeros((cout,), jnp.float32)
        p[f"stem_bn_v{i}"] = jnp.ones((cout,), jnp.float32)
    lchans = [(32, 64), (64, 64), (64, 64), (64, 64)]
    for i, (cin, cout) in enumerate(lchans):
        p[f"layer_w{i}"] = nrm((cout, cin, 1, 1), 0.1)
    # attnpool / shared projections
    p["v_w"] = nrm((C_VIS, C_VIS), 0.05); p["v_b"] = nrm((C_VIS,), 0.01)
    p["c_w"] = nrm((D, C_VIS), 0.05);     p["c_b"] = nrm((D,), 0.01)
    p["ap_q_w"] = nrm((C_VIS, C_VIS), 0.05); p["ap_q_b"] = nrm((C_VIS,), 0.01)
    p["ap_k_w"] = nrm((C_VIS, C_VIS), 0.05); p["ap_k_b"] = nrm((C_VIS,), 0.01)
    # prompt learner
    p["ctx"] = nrm((NCTX, CTXD))
    p["ctx_pos"] = nrm((NCTX, CTXD))
    p["ctx_neg"] = nrm((NCTX, CTXD))
    p["token_prefix"] = nrm((NCLS, 1, CTXD))
    p["token_suffix"] = nrm((NCLS, L - 1 - NCTX, CTXD))
    tok = jax.random.randint(next(ks), (NCLS, L), 1, 1000)
    p["tokenized"] = tok.at[:, 1 + NCTX + 2].set(49407)   # EOT token is the argmax
    # text transformer
    p["pos_emb"] = nrm((L, CTXD))
    for n in ["t_wq", "t_wk", "t_wv", "t_wo"]:
        p[n] = nrm((CTXD, CTXD))
    p["t_w1"] = nrm((CTXD, 2 * CTXD)); p["t_w2"] = nrm((2 * CTXD, CTXD))
    for n in ["t_ln1", "t_ln2", "lnf"]:
        p[n + "_g"] = jnp.ones((CTXD,), jnp.float32)
        p[n + "_b"] = jnp.zeros((CTXD,), jnp.float32)
    p["text_proj"] = nrm((CTXD, D))
    return p


if __name__ == "__main__":
    key = jax.random.PRNGKey(0)
    k_img, k_par = jax.random.split(key)
    image = jax.random.normal(k_img, (B, 3, IMG, IMG), jnp.float32)
    params = init_params(k_par)

    fwd = jax.jit(functools.partial(denseclip_forward, params))
    logits_g, logits_, image_features, text_features = fwd(image)
    jax.block_until_ready((logits_g, logits_, image_features, text_features))

    assert logits_g.shape == (B, NCLS)
    assert logits_.shape == (B, NCLS)
    assert image_features.shape == (HW, B, D)
    assert text_features.shape == (NCLS, D)
    assert bool(jnp.all(jnp.isfinite(logits_))) and bool(jnp.all(jnp.isfinite(logits_g)))
    print("KERNEL_OK")
</pallas_src>

<mosaic_0001>
module attributes {stable_mosaic.version = 11 : i64} {
  func.func @fused_dense_kernel(%arg0: memref<128x64xbf16, #tpu.memory_space<vmem>>, %arg1: memref<64x128xbf16, #tpu.memory_space<vmem>>, %arg2: memref<1x128xf32, #tpu.memory_space<vmem>>, %arg3: memref<128x24xbf16, #tpu.memory_space<vmem>>, %arg4: memref<2x128xf32, #tpu.memory_space<vmem>>, %arg5: memref<4x128xf32, #tpu.memory_space<vmem>>, %arg6: memref<2x64x128xf32, #tpu.memory_space<vmem>>) attributes {dimension_semantics = [], scalar_prefetch = 0 : i64, scratch_operands = 0 : i64, tpu.core_type = #tpu.core_type<tc>} {
    %c0 = arith.constant 0 : index
    %c0_0 = arith.constant 0 : index
    %0 = vector.load %arg0[%c0, %c0_0] : memref<128x64xbf16, #tpu.memory_space<vmem>>, vector<128x64xbf16>
    %c0_1 = arith.constant 0 : index
    %c0_2 = arith.constant 0 : index
    %1 = vector.load %arg1[%c0_1, %c0_2] : memref<64x128xbf16, #tpu.memory_space<vmem>>, vector<64x128xbf16>
    %cst = arith.constant dense<0.000000e+00> : vector<128x128xf32>
    %2 = tpu.matmul %0, %1, %cst {dimension_numbers = #tpu.dot_dimension_numbers<[1], [0], [0], [1], [0, 0, 1, 1], [], []>} : vector<128x64xbf16>, vector<64x128xbf16>, vector<128x128xf32> -> vector<128x128xf32>
    %c0_3 = arith.constant 0 : index
    %c0_4 = arith.constant 0 : index
    %3 = vector.load %arg2[%c0_3, %c0_4] : memref<1x128xf32, #tpu.memory_space<vmem>>, vector<1x128xf32>
    %4 = vector.broadcast %3 : vector<1x128xf32> to vector<128x128xf32>
    %5 = arith.addf %2, %4 : vector<128x128xf32>
    %6 = arith.mulf %5, %5 : vector<128x128xf32>
    %cst_5 = arith.constant dense<0.000000e+00> : vector<128xf32>
    %7 = vector.multi_reduction <add>, %6, %cst_5 [1] : vector<128x128xf32> to vector<128xf32>
    %8 = vector.shape_cast %7 : vector<128xf32> to vector<128x1xf32>
    %9 = math.rsqrt %8 : vector<128x1xf32>
    %10 = vector.broadcast %9 : vector<128x1xf32> to vector<128x128xf32>
    %11 = arith.mulf %5, %10 : vector<128x128xf32>
    %12 = vector.shape_cast %11 : vector<128x128xf32> to vector<2x64x128xf32>
    %c0_6 = arith.constant 0 : index
    %c0_7 = arith.constant 0 : index
    %c0_8 = arith.constant 0 : index
    %13 = vector.load %arg6[%c0_6, %c0_7, %c0_8] : memref<2x64x128xf32, #tpu.memory_space<vmem>>, vector<2x64x128xf32>
    tpu.vector_store %arg6[%c0_6, %c0_7, %c0_8], %12 {strides = array<i32>} : memref<2x64x128xf32, #tpu.memory_space<vmem>>, vector<2x64x128xf32>,
    %c0_9 = arith.constant 0 : index
    %c0_10 = arith.constant 0 : index
    %14 = vector.load %arg4[%c0_9, %c0_10] : memref<2x128xf32, #tpu.memory_space<vmem>>, vector<2x128xf32>
    %15 = arith.mulf %14, %14 : vector<2x128xf32>
    %cst_11 = arith.constant dense<0.000000e+00> : vector<2xf32>
    %16 = vector.multi_reduction <add>, %15, %cst_11 [1] : vector<2x128xf32> to vector<2xf32>
    %17 = vector.shape_cast %16 : vector<2xf32> to vector<2x1xf32>
    %18 = math.rsqrt %17 : vector<2x1xf32>
    %19 = vector.broadcast %18 : vector<2x1xf32> to vector<2x128xf32>
    %20 = arith.mulf %14, %19 : vector<2x128xf32>
    %c0_12 = arith.constant 0 : index
    %c0_13 = arith.constant 0 : index
    %21 = vector.load %arg3[%c0_12, %c0_13] : memref<128x24xbf16, #tpu.memory_space<vmem>>, vector<128x24xbf16>
    %22 = arith.truncf %11 : vector<128x128xf32> to vector<128x128xbf16>
    %cst_14 = arith.constant dense<0.000000e+00> : vector<128x24xf32>
    %23 = tpu.matmul %22, %21, %cst_14 {dimension_numbers = #tpu.dot_dimension_numbers<[1], [0], [0], [1], [0, 0, 1, 1], [], []>} : vector<128x128xbf16>, vector<128x24xbf16>, vector<128x24xf32> -> vector<128x24xf32>
    %24 = arith.truncf %20 : vector<2x128xf32> to vector<2x128xbf16>
    %cst_15 = arith.constant dense<0.000000e+00> : vector<2x24xf32>
    %25 = tpu.matmul %24, %21, %cst_15 {dimension_numbers = #tpu.dot_dimension_numbers<[1], [0], [0], [1], [0, 0, 1, 1], [], []>} : vector<2x128xbf16>, vector<128x24xbf16>, vector<2x24xf32> -> vector<2x24xf32>
    %26 = vector.extract_strided_slice %23 {offsets = [0, 0], sizes = [128, 8], strides = [1, 1]} : vector<128x24xf32> to vector<128x8xf32>
    %27 = vector.extract_strided_slice %23 {offsets = [0, 8], sizes = [128, 8], strides = [1, 1]} : vector<128x24xf32> to vector<128x8xf32>
    %28 = vector.extract_strided_slice %23 {offsets = [0, 16], sizes = [128, 8], strides = [1, 1]} : vector<128x24xf32> to vector<128x8xf32>
    %cst_16 = arith.constant 20.085537 : f32
    %29 = vector.broadcast %cst_16 : f32 to vector<128x8xf32>
    %30 = arith.mulf %29, %27 : vector<128x8xf32>
    %cst_17 = arith.constant 20.085537 : f32
    %31 = vector.broadcast %cst_17 : f32 to vector<128x8xf32>
    %32 = arith.mulf %31, %28 : vector<128x8xf32>
    %cst_18 = arith.constant dense<0xFF800000> : vector<128xf32>
    %33 = vector.multi_reduction <maximumf>, %27, %cst_18 [1] : vector<128x8xf32> to vector<128xf32>
    %34 = vector.shape_cast %33 : vector<128xf32> to vector<128x1xf32>
    %cst_19 = arith.constant 2.000000e+02 : f32
    %35 = vector.broadcast %cst_19 : f32 to vector<128x8xf32>
    %36 = arith.mulf %27, %35 : vector<128x8xf32>
    %37 = vector.broadcast %34 : vector<128x1xf32> to vector<128x8xf32>
    %38 = arith.mulf %36, %37 : vector<128x8xf32>
    %cst_20 = arith.constant dense<0xFF800000> : vector<128xf32>
    %39 = vector.multi_reduction <maximumf>, %38, %cst_20 [1] : vector<128x8xf32> to vector<128xf32>
    %40 = vector.shape_cast %39 : vector<128xf32> to vector<128x1xf32>
    %41 = vector.broadcast %40 : vector<128x1xf32> to vector<128x8xf32>
    %42 = arith.subf %38, %41 : vector<128x8xf32>
    %43 = math.exp %42 : vector<128x8xf32>
    %cst_21 = arith.constant dense<0.000000e+00> : vector<128xf32>
    %44 = vector.multi_reduction <add>, %43, %cst_21 [1] : vector<128x8xf32> to vector<128xf32>
    %45 = vector.shape_cast %44 : vector<128xf32> to vector<128x1xf32>
    %46 = tpu.reciprocal %45 {approx = true} : vector<128x1xf32> -> vector<128x1xf32>
    %47 = vector.broadcast %46 : vector<128x1xf32> to vector<128x8xf32>
    %48 = arith.mulf %43, %47 : vector<128x8xf32>
    %cst_22 = arith.constant 1.000000e+00 : f32
    %49 = vector.broadcast %cst_22 : f32 to vector<128x8xf32>
    %50 = arith.addf %49, %48 : vector<128x8xf32>
    %51 = arith.mulf %30, %50 : vector<128x8xf32>
    %52 = arith.subf %51, %32 : vector<128x8xf32>
    %53 = vector.extract_strided_slice %26 {offsets = [0, 0], sizes = [64, 8], strides = [1, 1]} : vector<128x8xf32> to vector<64x8xf32>
    %54 = vector.extract_strided_slice %52 {offsets = [0, 0], sizes = [64, 8], strides = [1, 1]} : vector<128x8xf32> to vector<64x8xf32>
    %cst_23 = arith.constant 20.085537 : f32
    %55 = vector.broadcast %cst_23 : f32 to vector<64x8xf32>
    %56 = arith.mulf %53, %55 : vector<64x8xf32>
    %cst_24 = arith.constant dense<0xFF800000> : vector<8xf32>
    %57 = vector.multi_reduction <maximumf>, %56, %cst_24 [0] : vector<64x8xf32> to vector<8xf32>
    %58 = vector.shape_cast %57 : vector<8xf32> to vector<1x8xf32>
    %59 = vector.broadcast %58 : vector<1x8xf32> to vector<64x8xf32>
    %60 = arith.subf %56, %59 : vector<64x8xf32>
    %61 = math.exp %60 : vector<64x8xf32>
    %cst_25 = arith.constant dense<0.000000e+00> : vector<8xf32>
    %62 = vector.multi_reduction <add>, %61, %cst_25 [0] : vector<64x8xf32> to vector<8xf32>
    %63 = vector.shape_cast %62 : vector<8xf32> to vector<1x8xf32>
    %64 = tpu.reciprocal %63 {approx = true} : vector<1x8xf32> -> vector<1x8xf32>
    %65 = vector.broadcast %64 : vector<1x8xf32> to vector<64x8xf32>
    %66 = arith.mulf %61, %65 : vector<64x8xf32>
    %67 = arith.mulf %54, %66 : vector<64x8xf32>
    %cst_26 = arith.constant dense<0.000000e+00> : vector<8xf32>
    %68 = vector.multi_reduction <add>, %67, %cst_26 [0] : vector<64x8xf32> to vector<8xf32>
    %69 = vector.shape_cast %68 : vector<8xf32> to vector<1x8xf32>
    %70 = vector.extract_strided_slice %26 {offsets = [64, 0], sizes = [64, 8], strides = [1, 1]} : vector<128x8xf32> to vector<64x8xf32>
    %71 = vector.extract_strided_slice %52 {offsets = [64, 0], sizes = [64, 8], strides = [1, 1]} : vector<128x8xf32> to vector<64x8xf32>
    %cst_27 = arith.constant 20.085537 : f32
    %72 = vector.broadcast %cst_27 : f32 to vector<64x8xf32>
    %73 = arith.mulf %70, %72 : vector<64x8xf32>
    %cst_28 = arith.constant dense<0xFF800000> : vector<8xf32>
    %74 = vector.multi_reduction <maximumf>, %73, %cst_28 [0] : vector<64x8xf32> to vector<8xf32>
    %75 = vector.shape_cast %74 : vector<8xf32> to vector<1x8xf32>
    %76 = vector.broadcast %75 : vector<1x8xf32> to vector<64x8xf32>
    %77 = arith.subf %73, %76 : vector<64x8xf32>
    %78 = math.exp %77 : vector<64x8xf32>
    %cst_29 = arith.constant dense<0.000000e+00> : vector<8xf32>
    %79 = vector.multi_reduction <add>, %78, %cst_29 [0] : vector<64x8xf32> to vector<8xf32>
    %80 = vector.shape_cast %79 : vector<8xf32> to vector<1x8xf32>
    %81 = tpu.reciprocal %80 {approx = true} : vector<1x8xf32> -> vector<1x8xf32>
    %82 = vector.broadcast %81 : vector<1x8xf32> to vector<64x8xf32>
    %83 = arith.mulf %78, %82 : vector<64x8xf32>
    %84 = arith.mulf %71, %83 : vector<64x8xf32>
    %cst_30 = arith.constant dense<0.000000e+00> : vector<8xf32>
    %85 = vector.multi_reduction <add>, %84, %cst_30 [0] : vector<64x8xf32> to vector<8xf32>
    %86 = vector.shape_cast %85 : vector<8xf32> to vector<1x8xf32>
    %87 = tpu.concatenate %69, %86 in 0 : vector<1x8xf32>, vector<1x8xf32> -> vector<2x8xf32>
    %88 = vector.extract_strided_slice %25 {offsets = [0, 8], sizes = [2, 8], strides = [1, 1]} : vector<2x24xf32> to vector<2x8xf32>
    %cst_31 = arith.constant 20.085537 : f32
    %89 = vector.broadcast %cst_31 : f32 to vector<2x8xf32>
    %90 = arith.mulf %89, %88 : vector<2x8xf32>
    %91 = vector.extract_strided_slice %25 {offsets = [0, 16], sizes = [2, 8], strides = [1, 1]} : vector<2x24xf32> to vector<2x8xf32>
    %cst_32 = arith.constant 20.085537 : f32
    %92 = vector.broadcast %cst_32 : f32 to vector<2x8xf32>
    %93 = arith.mulf %92, %91 : vector<2x8xf32>
    %94 = arith.subf %90, %93 : vector<2x8xf32>
    %95 = tpu.concatenate %87, %94 in 0 : vector<2x8xf32>, vector<2x8xf32> -> vector<4x8xf32>
    %cst_33 = arith.constant 0.000000e+00 : f32
    %96 = vector.broadcast %cst_33 : f32 to vector<4x120xf32>
    %97 = tpu.concatenate %95, %96 in 1 : vector<4x8xf32>, vector<4x120xf32> -> vector<4x128xf32>
    %c0_34 = arith.constant 0 : index
    %c0_35 = arith.constant 0 : index
    %98 = vector.load %arg5[%c0_34, %c0_35] : memref<4x128xf32, #tpu.memory_space<vmem>>, vector<4x128xf32>
    tpu.vector_store %arg5[%c0_34, %c0_35], %97 {strides = array<i32>} : memref<4x128xf32, #tpu.memory_space<vmem>>, vector<4x128xf32>,
    return
  }
}

</mosaic_0001>

<llo_original>
// kernel: denseclip_forward.1
$region0: #{denseclip_forward.1}
  #allocation0 [shape = 'u32[]', space=smem, size = 0x4, offset = 0x4, fixed_abs, tag = 'smem constant byte address 0x4 - core index']
  #allocation1 [shape = 'u32[144,128]{1,0:T(1,128)}', space=vmem, size = 0x12000, scoped, tag = 'internal scratch']
  %s0 = inlined_call_operand.vmem [shape: bf16[128,64], index: 0, kind: input, shape index: {}]
  %s1 = inlined_call_operand.vmem [shape: bf16[64,128], index: 1, kind: input, shape index: {}]
  %s2 = inlined_call_operand.vmem [shape: f32[1,128], index: 2, kind: input, shape index: {}]
  %s3 = inlined_call_operand.vmem [shape: bf16[128,24], index: 3, kind: input, shape index: {}]
  %s4 = inlined_call_operand.vmem [shape: f32[2,128], index: 4, kind: input, shape index: {}]
  %s5 = inlined_call_operand.vmem [shape: f32[4,128], index: 5, kind: output, shape index: {0}]
  %s6 = inlined_call_operand.vmem [shape: f32[2,64,128], index: 6, kind: output, shape index: {1}]
  %7 = xla_tuple %s5, %s6
  %s8 = sld [smem:[#allocation0]]
  $region38: #{denseclip_forward.1} parent=0
    _
  %s10 = ssub.s32 1, %s8
  %s11 = scalar_select 0, %s10, %s8
  // Predicated region
  $region2: #{denseclip_forward.1} parent=0 // pred_check
    _
  $region3: #{denseclip_forward.1} parent=0 // pred_check_branch
    %13 = sbr.rel (0) target = $region5
  $region4: #{denseclip_forward.1} parent=0 // pred_region
    _
  $region5: #{denseclip_forward.1} parent=0 // pred_fallthru
    _
  // Predicated region
  $region6: #{denseclip_forward.1} parent=0 // pred_check
    _
  $region7: #{denseclip_forward.1} parent=0 // pred_check_branch
    %15 = sbr.rel (0) target = $region9
  $region8: #{denseclip_forward.1} parent=0 // pred_region
    _
  $region9: #{denseclip_forward.1} parent=0 // pred_fallthru
    _
  // Predicated region
  $region10: #{denseclip_forward.1} parent=0 // pred_check
    _
  $region11: #{denseclip_forward.1} parent=0 // pred_check_branch
    %17 = sbr.rel (0) target = $region13
  $region12: #{denseclip_forward.1} parent=0 // pred_region
    _
  $region13: #{denseclip_forward.1} parent=0 // pred_fallthru
    _
  // Predicated region
  $region14: #{denseclip_forward.1} parent=0 // pred_check
    _
  $region15: #{denseclip_forward.1} parent=0 // pred_check_branch
    %19 = sbr.rel (0) target = $region17
  $region16: #{denseclip_forward.1} parent=0 // pred_region
    _
  $region17: #{denseclip_forward.1} parent=0 // pred_fallthru
    _
  // Predicated region
  $region18: #{denseclip_forward.1} parent=0 // pred_check
    _
  $region19: #{denseclip_forward.1} parent=0 // pred_check_branch
    %21 = sbr.rel (0) target = $region21
  $region20: #{denseclip_forward.1} parent=0 // pred_region
    _
  $region21: #{denseclip_forward.1} parent=0 // pred_fallthru
    _
  %v23 = vld [vmem:[%s0] sm:$0xf]
  %v24 = vld [vmem:[%s0 + $0x4] sm:$0xf]
  %v25 = vld [vmem:[%s0 + $0x8] sm:$0xf]
  %v26 = vld [vmem:[%s0 + $0xc] sm:$0xf]
  %v27 = vld [vmem:[%s0 + $0x10] sm:$0xf]
  %v28 = vld [vmem:[%s0 + $0x14] sm:$0xf]
  %v29 = vld [vmem:[%s0 + $0x18] sm:$0xf]
  %v30 = vld [vmem:[%s0 + $0x1c] sm:$0xf]
  %v31 = vld [vmem:[%s0 + $0x20] sm:$0xf]
  %v32 = vld [vmem:[%s0 + $0x24] sm:$0xf]
  %v33 = vld [vmem:[%s0 + $0x28] sm:$0xf]
  %v34 = vld [vmem:[%s0 + $0x2c] sm:$0xf]
  %v35 = vld [vmem:[%s0 + $0x30] sm:$0xf]
  %v36 = vld [vmem:[%s0 + $0x34] sm:$0xf]
  %v37 = vld [vmem:[%s0 + $0x38] sm:$0xf]
  %v38 = vld [vmem:[%s0 + $0x3c] sm:$0xf]
  %v39 = vld [vmem:[%s1] sm:$0xf]
  %v40 = vld [vmem:[%s1 + $0x4] sm:$0xf]
  %v41 = vld [vmem:[%s1 + $0x8] sm:$0xf]
  %v42 = vld [vmem:[%s1 + $0xc] sm:$0xf]
  %v43 = vld [vmem:[%s1 + $0x10] sm:$0xf]
  %v44 = vld [vmem:[%s1 + $0x14] sm:$0xf]
  %v45 = vld [vmem:[%s1 + $0x18] sm:$0xf]
  %v46 = vld [vmem:[%s1 + $0x1c] sm:$0xf]
  %v47 = vld [vmem:[%s2] sm:$0x1]
  %v49 = vlaneseq
  %v50 = vshrl.u32 %v49, 7
  %v51 = vsub.s32 0, %v50
  %v52 = vrot.slane %v47, %v51
  %v70 = vunpack.c.l.b16 %v23
  %v71 = vunpack.c.l.b16 %v24
  %v72 = vunpack.c.l.b16 %v25
  %v73 = vunpack.c.l.b16 %v26
  %v74 = vunpack.c.l.b16 %v27
  %v75 = vunpack.c.l.b16 %v28
  %v76 = vunpack.c.l.b16 %v29
  %v77 = vunpack.c.l.b16 %v30
  %v78 = vunpack.c.l.b16 %v31
  %v79 = vunpack.c.l.b16 %v32
  %v80 = vunpack.c.l.b16 %v33
  %v81 = vunpack.c.l.b16 %v34
  %v82 = vunpack.c.l.b16 %v35
  %v83 = vunpack.c.l.b16 %v36
  %v84 = vunpack.c.l.b16 %v37
  %v85 = vunpack.c.l.b16 %v38
  %v86 = vpack.c.b16 %v71, %v70
  %v87 = vpack.c.b16 %v73, %v72
  %v88 = vpack.c.b16 %v75, %v74
  %v89 = vpack.c.b16 %v77, %v76
  %v90 = vpack.c.b16 %v79, %v78
  %v91 = vpack.c.b16 %v81, %v80
  %v92 = vpack.c.b16 %v83, %v82
  %v93 = vpack.c.b16 %v85, %v84
  %v102 = vunpack.c.l.b16 %v39
  %v103 = vunpack.c.l.b16 %v40
  %v104 = vunpack.c.l.b16 %v41
  %v105 = vunpack.c.l.b16 %v42
  %v106 = vunpack.c.l.b16 %v43
  %v107 = vunpack.c.l.b16 %v44
  %v108 = vunpack.c.l.b16 %v45
  %v109 = vunpack.c.l.b16 %v46
  %v110 = vpack.c.b16 %v103, %v102
  %v111 = vpack.c.b16 %v105, %v104
  %v112 = vpack.c.b16 %v107, %v106
  %v113 = vpack.c.b16 %v109, %v108
  %vm118 = vcmask 523264
  %v120 = vsel %vm118, %v86, 0
  %v123 = vsel %vm118, %v87, 0
  %v126 = vsel %vm118, %v88, 0
  %v129 = vsel %vm118, %v89, 0
  %v132 = vsel %vm118, %v90, 0
  %v135 = vsel %vm118, %v91, 0
  %v138 = vsel %vm118, %v92, 0
  %v141 = vsel %vm118, %v93, 0
  %143 = vmatprep.subr.bf16.mxu0 0
  %144 = vmatpush1.bf16.msra.mxu0 0
  %145 = vmatprep.subr.bf16.mxu0 0
  %146 = vmatpush1.bf16.msra.mxu0 0
  %147 = vmatprep.subr.bf16.mxu0 0
  %148 = vmatpush1.bf16.msra.mxu0 0
  %149 = vmatprep.subr.bf16.mxu0 0
  %150 = vmatpush1.bf16.msra.mxu0 0
  %151 = vmatprep.subr.bf16.mxu0 0
  %152 = vmatpush1.bf16.msra.mxu0 %v113
  %153 = vmatprep.subr.bf16.mxu0 0
  %154 = vmatpush1.bf16.msra.mxu0 %v112
  %155 = vmatprep.subr.bf16.mxu0 0
  %156 = vmatpush1.bf16.msra.mxu0 %v111
  %157 = vmatprep.subr.bf16.mxu0 0
  %158 = vmatpush1.bf16.msra.mxu0 %v110
  %159 = vmatprep.subr.bf16.mxu0 0
  %160 = vmatpush2.bf16.msra.mxu0 0
  %161 = vmatprep.subr.bf16.mxu0 0
  %162 = vmatpush2.bf16.msra.mxu0 0
  %163 = vmatprep.subr.bf16.mxu0 0
  %164 = vmatpush2.bf16.msra.mxu0 0
  %165 = vmatprep.subr.bf16.mxu0 0
  %166 = vmatpush2.bf16.msra.mxu0 0
  %167 = vmatprep.subr.bf16.mxu0 0
  %168 = vmatpush2.bf16.msra.mxu0 0
  %169 = vmatprep.subr.bf16.mxu0 0
  %170 = vmatpush2.bf16.msra.mxu0 0
  %171 = vmatprep.subr.bf16.mxu0 0
  %172 = vmatpush2.bf16.msra.mxu0 0
  %173 = vmatprep.subr.bf16.mxu0 0
  %174 = vmatpush2.bf16.msra.mxu0 0
  %175 = vmatprep.mubr.bf16.mxu0 0
  %176 = vmatmul.mubr.bf16.gmra.mxu0 %v120
  %v177 = vpop.f32.mrf.mxu0
  %v178 = vadd.f32 %v52, %v177
  %v179 = vpop.f32.mrf.mxu0
  %v180 = vpop.f32.mrf.mxu0
  %v181 = vadd.f32 %v52, %v180
  %v182 = vpop.f32.mrf.mxu0
  %183 = vmatprep.mubr.bf16.mxu0 0
  %184 = vmatmul.mubr.bf16.gmra.mxu0 %v123
  %v185 = vpop.f32.mrf.mxu0
  %v186 = vadd.f32 %v52, %v185
  %v187 = vpop.f32.mrf.mxu0
  %v188 = vpop.f32.mrf.mxu0
  %v189 = vadd.f32 %v52, %v188
  %v190 = vpop.f32.mrf.mxu0
  %191 = vmatprep.mubr.bf16.mxu0 0
  %192 = vmatmul.mubr.bf16.gmra.mxu0 %v126
  %v193 = vpop.f32.mrf.mxu0
  %v194 = vadd.f32 %v52, %v193
  %v195 = vpop.f32.mrf.mxu0
  %v196 = vpop.f32.mrf.mxu0
  %v197 = vadd.f32 %v52, %v196
  %v198 = vpop.f32.mrf.mxu0
  %199 = vmatprep.mubr.bf16.mxu0 0
  %200 = vmatmul.mubr.bf16.gmra.mxu0 %v129
  %v201 = vpop.f32.mrf.mxu0
  %v202 = vadd.f32 %v52, %v201
  %v203 = vpop.f32.mrf.mxu0
  %v204 = vpop.f32.mrf.mxu0
  %v205 = vadd.f32 %v52, %v204
  %v206 = vpop.f32.mrf.mxu0
  %207 = vmatprep.mubr.bf16.mxu0 0
  %208 = vmatmul.mubr.bf16.gmra.mxu0 %v132
  %v209 = vpop.f32.mrf.mxu0
  %v210 = vadd.f32 %v52, %v209
  %v211 = vpop.f32.mrf.mxu0
  %v212 = vpop.f32.mrf.mxu0
  %v213 = vadd.f32 %v52, %v212
  %v214 = vpop.f32.mrf.mxu0
  %215 = vmatprep.mubr.bf16.mxu0 0
  %216 = vmatmul.mubr.bf16.gmra.mxu0 %v135
  %v217 = vpop.f32.mrf.mxu0
  %v218 = vadd.f32 %v52, %v217
  %v219 = vpop.f32.mrf.mxu0
  %v220 = vpop.f32.mrf.mxu0
  %v221 = vadd.f32 %v52, %v220
  %v222 = vpop.f32.mrf.mxu0
  %223 = vmatprep.mubr.bf16.mxu0 0
  %224 = vmatmul.mubr.bf16.gmra.mxu0 %v138
  %v225 = vpop.f32.mrf.mxu0
  %v226 = vadd.f32 %v52, %v225
  %v227 = vpop.f32.mrf.mxu0
  %v228 = vpop.f32.mrf.mxu0
  %v229 = vadd.f32 %v52, %v228
  %v230 = vpop.f32.mrf.mxu0
  %231 = vmatprep.mubr.bf16.mxu0 0
  %232 = vmatmul.mubr.bf16.gmra.mxu0 %v141
  %v233 = vpop.f32.mrf.mxu0
  %v234 = vadd.f32 %v52, %v233
  %v235 = vpop.f32.mrf.mxu0
  %v236 = vpop.f32.mrf.mxu0
  %v237 = vadd.f32 %v52, %v236
  %v238 = vpop.f32.mrf.mxu0
  %239 = vdwg.mxu0
  %v240 = vmul.f32 %v178, %v178
  %v241 = vmul.f32 %v181, %v181
  %v242 = vmul.f32 %v186, %v186
  %v243 = vmul.f32 %v189, %v189
  %v244 = vmul.f32 %v194, %v194
  %v245 = vmul.f32 %v197, %v197
  %v246 = vmul.f32 %v202, %v202
  %v247 = vmul.f32 %v205, %v205
  %v248 = vmul.f32 %v210, %v210
  %v249 = vmul.f32 %v213, %v213
  %v250 = vmul.f32 %v218, %v218
  %v251 = vmul.f32 %v221, %v221
  %v252 = vmul.f32 %v226, %v226
  %v253 = vmul.f32 %v229, %v229
  %v254 = vmul.f32 %v234, %v234
  %v255 = vmul.f32 %v237, %v237
  %256 = vadd.xlane.f32.xlu0 %v240
  %v257 = vpop.xlane.xlu0 %256
  %258 = vadd.xlane.f32.xlu0 %v241
  %v259 = vpop.xlane.xlu0 %258
  %260 = vadd.xlane.f32.xlu0 %v242
  %v261 = vpop.xlane.xlu0 %260
  %262 = vadd.xlane.f32.xlu0 %v243
  %v263 = vpop.xlane.xlu0 %262
  %264 = vadd.xlane.f32.xlu0 %v244
  %v265 = vpop.xlane.xlu0 %264
  %266 = vadd.xlane.f32.xlu0 %v245
  %v267 = vpop.xlane.xlu0 %266
  %268 = vadd.xlane.f32.xlu0 %v246
  %v269 = vpop.xlane.xlu0 %268
  %270 = vadd.xlane.f32.xlu0 %v247
  %v271 = vpop.xlane.xlu0 %270
  %272 = vadd.xlane.f32.xlu0 %v248
  %v273 = vpop.xlane.xlu0 %272
  %274 = vadd.xlane.f32.xlu0 %v249
  %v275 = vpop.xlane.xlu0 %274
  %276 = vadd.xlane.f32.xlu0 %v250
  %v277 = vpop.xlane.xlu0 %276
  %278 = vadd.xlane.f32.xlu0 %v251
  %v279 = vpop.xlane.xlu0 %278
  %280 = vadd.xlane.f32.xlu0 %v252
  %v281 = vpop.xlane.xlu0 %280
  %282 = vadd.xlane.f32.xlu0 %v253
  %v283 = vpop.xlane.xlu0 %282
  %284 = vadd.xlane.f32.xlu0 %v254
  %v285 = vpop.xlane.xlu0 %284
  %286 = vadd.xlane.f32.xlu0 %v255
  %v287 = vpop.xlane.xlu0 %286
  %v288 = vrsqrt.pop %v257
  %v289 = vrsqrt.pop %v259
  %v290 = vrsqrt.pop %v261
  %v291 = vrsqrt.pop %v263
  %v292 = vrsqrt.pop %v265
  %v293 = vrsqrt.pop %v267
  %v294 = vrsqrt.pop %v269
  %v295 = vrsqrt.pop %v271
  %v296 = vrsqrt.pop %v273
  %v297 = vrsqrt.pop %v275
  %v298 = vrsqrt.pop %v277
  %v299 = vrsqrt.pop %v279
  %v300 = vrsqrt.pop %v281
  %v301 = vrsqrt.pop %v283
  %v302 = vrsqrt.pop %v285
  %v303 = vrsqrt.pop %v287
  %v304 = vmul.f32 %v178, %v288
  %v305 = vmul.f32 %v181, %v289
  %v306 = vmul.f32 %v186, %v290
  %v307 = vmul.f32 %v189, %v291
  %v308 = vmul.f32 %v194, %v292
  %v309 = vmul.f32 %v197, %v293
  %v310 = vmul.f32 %v202, %v294
  %v311 = vmul.f32 %v205, %v295
  %v312 = vmul.f32 %v210, %v296
  %v313 = vmul.f32 %v213, %v297
  %v314 = vmul.f32 %v218, %v298
  %v315 = vmul.f32 %v221, %v299
  %v316 = vmul.f32 %v226, %v300
  %v317 = vmul.f32 %v229, %v301
  %v318 = vmul.f32 %v234, %v302
  %v319 = vmul.f32 %v237, %v303
  %320 = vst [vmem:[%s6] sm:$0xff] %v304
  %321 = vst [vmem:[%s6 + $0x8] sm:$0xff] %v305
  %322 = vst [vmem:[%s6 + $0x10] sm:$0xff] %v306
  %323 = vst [vmem:[%s6 + $0x18] sm:$0xff] %v307
  %324 = vst [vmem:[%s6 + $0x20] sm:$0xff] %v308
  %325 = vst [vmem:[%s6 + $0x28] sm:$0xff] %v309
  %326 = vst [vmem:[%s6 + $0x30] sm:$0xff] %v310
  %327 = vst [vmem:[%s6 + $0x38] sm:$0xff] %v311
  %328 = vst [vmem:[%s6 + $0x40] sm:$0xff] %v312
  %329 = vst [vmem:[%s6 + $0x48] sm:$0xff] %v313
  %330 = vst [vmem:[%s6 + $0x50] sm:$0xff] %v314
  %331 = vst [vmem:[%s6 + $0x58] sm:$0xff] %v315
  %332 = vst [vmem:[%s6 + $0x60] sm:$0xff] %v316
  %333 = vst [vmem:[%s6 + $0x68] sm:$0xff] %v317
  %334 = vst [vmem:[%s6 + $0x70] sm:$0xff] %v318
  %335 = vst [vmem:[%s6 + $0x78] sm:$0xff] %v319
  %v336 = vld [vmem:[%s4] sm:$0x3]
  %v337 = vmul.f32 %v336, %v336
  %vm338 = vcmask 1041408
  %v339 = vsel %vm338, %v337, 0.0
  %340 = vadd.xlane.f32.xlu0 %v339
  %v341 = vpop.xlane.xlu0 %340
  %v342 = vrsqrt.pop %v341
  %v343 = vmul.f32 %v336, %v342
  %v344 = vld [vmem:[%s3] sm:$0xf]
  %v345 = vld [vmem:[%s3 + $0x4] sm:$0xf]
  %v346 = vld [vmem:[%s3 + $0x8] sm:$0xf]
  %v347 = vld [vmem:[%s3 + $0xc] sm:$0xf]
  %v348 = vld [vmem:[%s3 + $0x10] sm:$0xf]
  %v349 = vld [vmem:[%s3 + $0x14] sm:$0xf]
  %v350 = vld [vmem:[%s3 + $0x18] sm:$0xf]
  %v351 = vld [vmem:[%s3 + $0x1c] sm:$0xf]
  %v352 = vld [vmem:[%s3 + $0x20] sm:$0xf]
  %v353 = vld [vmem:[%s3 + $0x24] sm:$0xf]
  %v354 = vld [vmem:[%s3 + $0x28] sm:$0xf]
  %v355 = vld [vmem:[%s3 + $0x2c] sm:$0xf]
  %v356 = vld [vmem:[%s3 + $0x30] sm:$0xf]
  %v357 = vld [vmem:[%s3 + $0x34] sm:$0xf]
  %v358 = vld [vmem:[%s3 + $0x38] sm:$0xf]
  %v359 = vld [vmem:[%s3 + $0x3c] sm:$0xf]
  %v360 = vpack.c.bf16 %v305, %v304
  %v361 = vpack.c.bf16 %v307, %v306
  %v362 = vpack.c.bf16 %v309, %v308
  %v363 = vpack.c.bf16 %v311, %v310
  %v364 = vpack.c.bf16 %v313, %v312
  %v365 = vpack.c.bf16 %v315, %v314
  %v366 = vpack.c.bf16 %v317, %v316
  %v367 = vpack.c.bf16 %v319, %v318
  %v384 = vunpack.c.l.b16 %v344
  %v385 = vunpack.c.l.b16 %v345
  %v386 = vunpack.c.l.b16 %v346
  %v387 = vunpack.c.l.b16 %v347
  %v388 = vunpack.c.l.b16 %v348
  %v389 = vunpack.c.l.b16 %v349
  %v390 = vunpack.c.l.b16 %v350
  %v391 = vunpack.c.l.b16 %v351
  %v392 = vunpack.c.l.b16 %v352
  %v393 = vunpack.c.l.b16 %v353
  %v394 = vunpack.c.l.b16 %v354
  %v395 = vunpack.c.l.b16 %v355
  %v396 = vunpack.c.l.b16 %v356
  %v397 = vunpack.c.l.b16 %v357
  %v398 = vunpack.c.l.b16 %v358
  %v399 = vunpack.c.l.b16 %v359
  %v400 = vpack.c.b16 %v385, %v384
  %v401 = vpack.c.b16 %v387, %v386
  %v402 = vpack.c.b16 %v389, %v388
  %v403 = vpack.c.b16 %v391, %v390
  %v404 = vpack.c.b16 %v393, %v392
  %v405 = vpack.c.b16 %v395, %v394
  %v406 = vpack.c.b16 %v397, %v396
  %v407 = vpack.c.b16 %v399, %v398
  %416 = vmatprep.subr.bf16.mxu0 0
  %417 = vmatpush1.bf16.msra.mxu0 %v407
  %418 = vmatprep.subr.bf16.mxu0 0
  %419 = vmatpush1.bf16.msra.mxu0 %v406
  %420 = vmatprep.subr.bf16.mxu0 0
  %421 = vmatpush1.bf16.msra.mxu0 %v405
  %422 = vmatprep.subr.bf16.mxu0 0
  %423 = vmatpush1.bf16.msra.mxu0 %v404
  %424 = vmatprep.subr.bf16.mxu0 0
  %425 = vmatpush1.bf16.msra.mxu0 %v403
  %426 = vmatprep.subr.bf16.mxu0 0
  %427 = vmatpush1.bf16.msra.mxu0 %v402
  %428 = vmatprep.subr.bf16.mxu0 0
  %429 = vmatpush1.bf16.msra.mxu0 %v401
  %430 = vmatprep.subr.bf16.mxu0 0
  %431 = vmatpush1.bf16.msra.mxu0 %v400
  %432 = vmatprep.subr.bf16.mxu0 0
  %433 = vmatpush2.bf16.msra.mxu0 0
  %434 = vmatprep.subr.bf16.mxu0 0
  %435 = vmatpush2.bf16.msra.mxu0 0
  %436 = vmatprep.subr.bf16.mxu0 0
  %437 = vmatpush2.bf16.msra.mxu0 0
  %438 = vmatprep.subr.bf16.mxu0 0
  %439 = vmatpush2.bf16.msra.mxu0 0
  %440 = vmatprep.subr.bf16.mxu0 0
  %441 = vmatpush2.bf16.msra.mxu0 0
  %442 = vmatprep.subr.bf16.mxu0 0
  %443 = vmatpush2.bf16.msra.mxu0 0
  %444 = vmatprep.subr.bf16.mxu0 0
  %445 = vmatpush2.bf16.msra.mxu0 0
  %446 = vmatprep.subr.bf16.mxu0 0
  %447 = vmatpush2.bf16.msra.mxu0 0
  %448 = vmatprep.mubr.bf16.mxu0 0
  %449 = vmatmul.mubr.bf16.gmra.mxu0 %v360
  %v450 = vpop.f32.mrf.mxu0
  %v451 = vadd.f32 0.0, %v450
  %v452 = vpop.f32.mrf.mxu0
  %v453 = vpop.f32.mrf.mxu0
  %v454 = vadd.f32 0.0, %v453
  %v455 = vpop.f32.mrf.mxu0
  %456 = vmatprep.mubr.bf16.mxu0 0
  %457 = vmatmul.mubr.bf16.gmra.mxu0 %v361
  %v458 = vpop.f32.mrf.mxu0
  %v459 = vadd.f32 0.0, %v458
  %v460 = vpop.f32.mrf.mxu0
  %v461 = vpop.f32.mrf.mxu0
  %v462 = vadd.f32 0.0, %v461
  %v463 = vpop.f32.mrf.mxu0
  %464 = vmatprep.mubr.bf16.mxu0 0
  %465 = vmatmul.mubr.bf16.gmra.mxu0 %v362
  %v466 = vpop.f32.mrf.mxu0
  %v467 = vadd.f32 0.0, %v466
  %v468 = vpop.f32.mrf.mxu0
  %v469 = vpop.f32.mrf.mxu0
  %v470 = vadd.f32 0.0, %v469
  %v471 = vpop.f32.mrf.mxu0
  %472 = vmatprep.mubr.bf16.mxu0 0
  %473 = vmatmul.mubr.bf16.gmra.mxu0 %v363
  %v474 = vpop.f32.mrf.mxu0
  %v475 = vadd.f32 0.0, %v474
  %v476 = vpop.f32.mrf.mxu0
  %v477 = vpop.f32.mrf.mxu0
  %v478 = vadd.f32 0.0, %v477
  %v479 = vpop.f32.mrf.mxu0
  %480 = vmatprep.mubr.bf16.mxu0 0
  %481 = vmatmul.mubr.bf16.gmra.mxu0 %v364
  %v482 = vpop.f32.mrf.mxu0
  %v483 = vadd.f32 0.0, %v482
  %v484 = vpop.f32.mrf.mxu0
  %v485 = vpop.f32.mrf.mxu0
  %v486 = vadd.f32 0.0, %v485
  %v487 = vpop.f32.mrf.mxu0
  %488 = vmatprep.mubr.bf16.mxu0 0
  %489 = vmatmul.mubr.bf16.gmra.mxu0 %v365
  %v490 = vpop.f32.mrf.mxu0
  %v491 = vadd.f32 0.0, %v490
  %v492 = vpop.f32.mrf.mxu0
  %v493 = vpop.f32.mrf.mxu0
  %v494 = vadd.f32 0.0, %v493
  %v495 = vpop.f32.mrf.mxu0
  %496 = vmatprep.mubr.bf16.mxu0 0
  %497 = vmatmul.mubr.bf16.gmra.mxu0 %v366
  %v498 = vpop.f32.mrf.mxu0
  %v499 = vadd.f32 0.0, %v498
  %v500 = vpop.f32.mrf.mxu0
  %v501 = vpop.f32.mrf.mxu0
  %v502 = vadd.f32 0.0, %v501
  %v503 = vpop.f32.mrf.mxu0
  %504 = vmatprep.mubr.bf16.mxu0 0
  %505 = vmatmul.mubr.bf16.gmra.mxu0 %v367
  %v506 = vpop.f32.mrf.mxu0
  %v507 = vadd.f32 0.0, %v506
  %v508 = vpop.f32.mrf.mxu0
  %v509 = vpop.f32.mrf.mxu0
  %v510 = vadd.f32 0.0, %v509
  %v511 = vpop.f32.mrf.mxu0
  %512 = vdwg.mxu0
  %v513 = vpack.c.bf16 %v343, %v343
  %514 = vmatprep.subr.bf16.mxu0 0
  %515 = vmatpush1.bf16.msra.mxu0 %v407
  %516 = vmatprep.subr.bf16.mxu0 0
  %517 = vmatpush1.bf16.msra.mxu0 %v406
  %518 = vmatprep.subr.bf16.mxu0 0
  %519 = vmatpush1.bf16.msra.mxu0 %v405
  %520 = vmatprep.subr.bf16.mxu0 0
  %521 = vmatpush1.bf16.msra.mxu0 %v404
  %522 = vmatprep.subr.bf16.mxu0 0
  %523 = vmatpush1.bf16.msra.mxu0 %v403
  %524 = vmatprep.subr.bf16.mxu0 0
  %525 = vmatpush1.bf16.msra.mxu0 %v402
  %526 = vmatprep.subr.bf16.mxu0 0
  %527 = vmatpush1.bf16.msra.mxu0 %v401
  %528 = vmatprep.subr.bf16.mxu0 0
  %529 = vmatpush1.bf16.msra.mxu0 %v400
  %530 = vmatprep.subr.bf16.mxu0 0
  %531 = vmatpush2.bf16.msra.mxu0 0
  %532 = vmatprep.subr.bf16.mxu0 0
  %533 = vmatpush2.bf16.msra.mxu0 0
  %534 = vmatprep.subr.bf16.mxu0 0
  %535 = vmatpush2.bf16.msra.mxu0 0
  %536 = vmatprep.subr.bf16.mxu0 0
  %537 = vmatpush2.bf16.msra.mxu0 0
  %538 = vmatprep.subr.bf16.mxu0 0
  %539 = vmatpush2.bf16.msra.mxu0 0
  %540 = vmatprep.subr.bf16.mxu0 0
  %541 = vmatpush2.bf16.msra.mxu0 0
  %542 = vmatprep.subr.bf16.mxu0 0
  %543 = vmatpush2.bf16.msra.mxu0 0
  %544 = vmatprep.subr.bf16.mxu0 0
  %545 = vmatpush2.bf16.msra.mxu0 0
  %546 = vmatprep.mubr.bf16.mxu0 0
  %547 = vmatmul.mubr.bf16.gmra.mxu0 %v513
  %v548 = vpop.f32.mrf.mxu0
  %v549 = vadd.f32 0.0, %v548
  %v550 = vpop.f32.mrf.mxu0
  %v551 = vpop.f32.mrf.mxu0
  %v552 = vpop.f32.mrf.mxu0
  %553 = vdwg.mxu0
  %v554 = vmul.f32 %v451, 20.085537
  %v555 = vmul.f32 %v454, 20.085537
  %v556 = vmul.f32 %v459, 20.085537
  %v557 = vmul.f32 %v462, 20.085537
  %v558 = vmul.f32 %v467, 20.085537
  %v559 = vmul.f32 %v470, 20.085537
  %v560 = vmul.f32 %v475, 20.085537
  %v561 = vmul.f32 %v478, 20.085537
  %v562 = vmul.f32 %v483, 20.085537
  %v563 = vmul.f32 %v486, 20.085537
  %v564 = vmul.f32 %v491, 20.085537
  %v565 = vmul.f32 %v494, 20.085537
  %v566 = vmul.f32 %v499, 20.085537
  %v567 = vmul.f32 %v502, 20.085537
  %v568 = vmul.f32 %v507, 20.085537
  %v569 = vmul.f32 %v510, 20.085537
  %vm570 = vcmask 130112
  %v571 = vsel %vm570, %v451, -inf
  %572 = vmax.xlane.f32.xlu0 %v571
  %v573 = vpop.xlane.xlu0 %572
  %v574 = vsel %vm570, %v454, -inf
  %575 = vmax.xlane.f32.xlu0 %v574
  %v576 = vpop.xlane.xlu0 %575
  %v577 = vsel %vm570, %v459, -inf
  %578 = vmax.xlane.f32.xlu0 %v577
  %v579 = vpop.xlane.xlu0 %578
  %v580 = vsel %vm570, %v462, -inf
  %581 = vmax.xlane.f32.xlu0 %v580
  %v582 = vpop.xlane.xlu0 %581
  %v583 = vsel %vm570, %v467, -inf
  %584 = vmax.xlane.f32.xlu0 %v583
  %v585 = vpop.xlane.xlu0 %584
  %v586 = vsel %vm570, %v470, -inf
  %587 = vmax.xlane.f32.xlu0 %v586
  %v588 = vpop.xlane.xlu0 %587
  %v589 = vsel %vm570, %v475, -inf
  %590 = vmax.xlane.f32.xlu0 %v589
  %v591 = vpop.xlane.xlu0 %590
  %v592 = vsel %vm570, %v478, -inf
  %593 = vmax.xlane.f32.xlu0 %v592
  %v594 = vpop.xlane.xlu0 %593
  %v595 = vsel %vm570, %v483, -inf
  %596 = vmax.xlane.f32.xlu0 %v595
  %v597 = vpop.xlane.xlu0 %596
  %v598 = vsel %vm570, %v486, -inf
  %599 = vmax.xlane.f32.xlu0 %v598
  %v600 = vpop.xlane.xlu0 %599
  %v601 = vsel %vm570, %v491, -inf
  %602 = vmax.xlane.f32.xlu0 %v601
  %v603 = vpop.xlane.xlu0 %602
  %v604 = vsel %vm570, %v494, -inf
  %605 = vmax.xlane.f32.xlu0 %v604
  %v606 = vpop.xlane.xlu0 %605
  %v607 = vsel %vm570, %v499, -inf
  %608 = vmax.xlane.f32.xlu0 %v607
  %v609 = vpop.xlane.xlu0 %608
  %v610 = vsel %vm570, %v502, -inf
  %611 = vmax.xlane.f32.xlu0 %v610
  %v612 = vpop.xlane.xlu0 %611
  %v613 = vsel %vm570, %v507, -inf
  %614 = vmax.xlane.f32.xlu0 %v613
  %v615 = vpop.xlane.xlu0 %614
  %v616 = vsel %vm570, %v510, -inf
  %617 = vmax.xlane.f32.xlu0 %v616
  %v618 = vpop.xlane.xlu0 %617
  %v619 = vmul.f32 %v451, 200.0
  %v620 = vmul.f32 %v454, 200.0
  %v621 = vmul.f32 %v459, 200.0
  %v622 = vmul.f32 %v462, 200.0
  %v623 = vmul.f32 %v467, 200.0
  %v624 = vmul.f32 %v470, 200.0
  %v625 = vmul.f32 %v475, 200.0
  %v626 = vmul.f32 %v478, 200.0
  %v627 = vmul.f32 %v483, 200.0
  %v628 = vmul.f32 %v486, 200.0
  %v629 = vmul.f32 %v491, 200.0
  %v630 = vmul.f32 %v494, 200.0
  %v631 = vmul.f32 %v499, 200.0
  %v632 = vmul.f32 %v502, 200.0
  %v633 = vmul.f32 %v507, 200.0
  %v634 = vmul.f32 %v510, 200.0
  %v635 = vmul.f32 %v619, %v573
  %v636 = vmul.f32 %v620, %v576
  %v637 = vmul.f32 %v621, %v579
  %v638 = vmul.f32 %v622, %v582
  %v639 = vmul.f32 %v623, %v585
  %v640 = vmul.f32 %v624, %v588
  %v641 = vmul.f32 %v625, %v591
  %v642 = vmul.f32 %v626, %v594
  %v643 = vmul.f32 %v627, %v597
  %v644 = vmul.f32 %v628, %v600
  %v645 = vmul.f32 %v629, %v603
  %v646 = vmul.f32 %v630, %v606
  %v647 = vmul.f32 %v631, %v609
  %v648 = vmul.f32 %v632, %v612
  %v649 = vmul.f32 %v633, %v615
  %v650 = vmul.f32 %v634, %v618
  %v651 = vsel %vm570, %v635, -inf
  %652 = vmax.xlane.f32.xlu0 %v651
  %v653 = vpop.xlane.xlu0 %652
  %v654 = vsel %vm570, %v636, -inf
  %655 = vmax.xlane.f32.xlu0 %v654
  %v656 = vpop.xlane.xlu0 %655
  %v657 = vsel %vm570, %v637, -inf
  %658 = vmax.xlane.f32.xlu0 %v657
  %v659 = vpop.xlane.xlu0 %658
  %v660 = vsel %vm570, %v638, -inf
  %661 = vmax.xlane.f32.xlu0 %v660
  %v662 = vpop.xlane.xlu0 %661
  %v663 = vsel %vm570, %v639, -inf
  %664 = vmax.xlane.f32.xlu0 %v663
  %v665 = vpop.xlane.xlu0 %664
  %v666 = vsel %vm570, %v640, -inf
  %667 = vmax.xlane.f32.xlu0 %v666
  %v668 = vpop.xlane.xlu0 %667
  %v669 = vsel %vm570, %v641, -inf
  %670 = vmax.xlane.f32.xlu0 %v669
  %v671 = vpop.xlane.xlu0 %670
  %v672 = vsel %vm570, %v642, -inf
  %673 = vmax.xlane.f32.xlu0 %v672
  %v674 = vpop.xlane.xlu0 %673
  %v675 = vsel %vm570, %v643, -inf
  %676 = vmax.xlane.f32.xlu0 %v675
  %v677 = vpop.xlane.xlu0 %676
  %v678 = vsel %vm570, %v644, -inf
  %679 = vmax.xlane.f32.xlu0 %v678
  %v680 = vpop.xlane.xlu0 %679
  %v681 = vsel %vm570, %v645, -inf
  %682 = vmax.xlane.f32.xlu0 %v681
  %v683 = vpop.xlane.xlu0 %682
  %v684 = vsel %vm570, %v646, -inf
  %685 = vmax.xlane.f32.xlu0 %v684
  %v686 = vpop.xlane.xlu0 %685
  %v687 = vsel %vm570, %v647, -inf
  %688 = vmax.xlane.f32.xlu0 %v687
  %v689 = vpop.xlane.xlu0 %688
  %v690 = vsel %vm570, %v648, -inf
  %691 = vmax.xlane.f32.xlu0 %v690
  %v692 = vpop.xlane.xlu0 %691
  %v693 = vsel %vm570, %v649, -inf
  %694 = vmax.xlane.f32.xlu0 %v693
  %v695 = vpop.xlane.xlu0 %694
  %v696 = vsel %vm570, %v650, -inf
  %697 = vmax.xlane.f32.xlu0 %v696
  %v698 = vpop.xlane.xlu0 %697
  %v699 = vsub.f32 %v635, %v653
  %v700 = vsub.f32 %v636, %v656
  %v701 = vsub.f32 %v637, %v659
  %v702 = vsub.f32 %v638, %v662
  %v703 = vsub.f32 %v639, %v665
  %v704 = vsub.f32 %v640, %v668
  %v705 = vsub.f32 %v641, %v671
  %v706 = vsub.f32 %v642, %v674
  %v707 = vsub.f32 %v643, %v677
  %v708 = vsub.f32 %v644, %v680
  %v709 = vsub.f32 %v645, %v683
  %v710 = vsub.f32 %v646, %v686
  %v711 = vsub.f32 %v647, %v689
  %v712 = vsub.f32 %v648, %v692
  %v713 = vsub.f32 %v649, %v695
  %v714 = vsub.f32 %v650, %v698
  %v715 = vmul.f32 %v699, 1.442695
  %v716 = vpow.pop %v715
  %v717 = vmul.f32 %v700, 1.442695
  %v718 = vpow.pop %v717
  %v719 = vmul.f32 %v701, 1.442695
  %v720 = vpow.pop %v719
  %v721 = vmul.f32 %v702, 1.442695
  %v722 = vpow.pop %v721
  %v723 = vmul.f32 %v703, 1.442695
  %v724 = vpow.pop %v723
  %v725 = vmul.f32 %v704, 1.442695
  %v726 = vpow.pop %v725
  %v727 = vmul.f32 %v705, 1.442695
  %v728 = vpow.pop %v727
  %v729 = vmul.f32 %v706, 1.442695
  %v730 = vpow.pop %v729
  %v731 = vmul.f32 %v707, 1.442695
  %v732 = vpow.pop %v731
  %v733 = vmul.f32 %v708, 1.442695
  %v734 = vpow.pop %v733
  %v735 = vmul.f32 %v709, 1.442695
  %v736 = vpow.pop %v735
  %v737 = vmul.f32 %v710, 1.442695
  %v738 = vpow.pop %v737
  %v739 = vmul.f32 %v711, 1.442695
  %v740 = vpow.pop %v739
  %v741 = vmul.f32 %v712, 1.442695
  %v742 = vpow.pop %v741
  %v743 = vmul.f32 %v713, 1.442695
  %v744 = vpow.pop %v743
  %v745 = vmul.f32 %v714, 1.442695
  %v746 = vpow.pop %v745
  %763 = vrot.lane.b32.xlu0 %v716, 120
  %v764 = vpop.permute.xlu0 %763
  %765 = vrot.lane.b32.xlu0 %v718, 120
  %v766 = vpop.permute.xlu0 %765
  %767 = vrot.lane.b32.xlu0 %v720, 120
  %v768 = vpop.permute.xlu0 %767
  %769 = vrot.lane.b32.xlu0 %v722, 120
  %v770 = vpop.permute.xlu0 %769
  %771 = vrot.lane.b32.xlu0 %v724, 120
  %v772 = vpop.permute.xlu0 %771
  %773 = vrot.lane.b32.xlu0 %v726, 120
  %v774 = vpop.permute.xlu0 %773
  %775 = vrot.lane.b32.xlu0 %v728, 120
  %v776 = vpop.permute.xlu0 %775
  %777 = vrot.lane.b32.xlu0 %v730, 120
  %v778 = vpop.permute.xlu0 %777
  %779 = vrot.lane.b32.xlu0 %v732, 120
  %v780 = vpop.permute.xlu0 %779
  %781 = vrot.lane.b32.xlu0 %v734, 120
  %v782 = vpop.permute.xlu0 %781
  %783 = vrot.lane.b32.xlu0 %v736, 120
  %v784 = vpop.permute.xlu0 %783
  %785 = vrot.lane.b32.xlu0 %v738, 120
  %v786 = vpop.permute.xlu0 %785
  %787 = vrot.lane.b32.xlu0 %v740, 120
  %v788 = vpop.permute.xlu0 %787
  %789 = vrot.lane.b32.xlu0 %v742, 120
  %v790 = vpop.permute.xlu0 %789
  %791 = vrot.lane.b32.xlu0 %v744, 120
  %v792 = vpop.permute.xlu0 %791
  %793 = vrot.lane.b32.xlu0 %v746, 120
  %v794 = vpop.permute.xlu0 %793
  %vm811 = vcmask 64512
  %v812 = vsel %vm811, %v764, 0.0
  %813 = vadd.xlane.f32.xlu0 %v812
  %v814 = vpop.xlane.xlu0 %813
  %v815 = vsel %vm811, %v766, 0.0
  %816 = vadd.xlane.f32.xlu0 %v815
  %v817 = vpop.xlane.xlu0 %816
  %v818 = vsel %vm811, %v768, 0.0
  %819 = vadd.xlane.f32.xlu0 %v818
  %v820 = vpop.xlane.xlu0 %819
  %v821 = vsel %vm811, %v770, 0.0
  %822 = vadd.xlane.f32.xlu0 %v821
  %v823 = vpop.xlane.xlu0 %822
  %v824 = vsel %vm811, %v772, 0.0
  %825 = vadd.xlane.f32.xlu0 %v824
  %v826 = vpop.xlane.xlu0 %825
  %v827 = vsel %vm811, %v774, 0.0
  %828 = vadd.xlane.f32.xlu0 %v827
  %v829 = vpop.xlane.xlu0 %828
  %v830 = vsel %vm811, %v776, 0.0
  %831 = vadd.xlane.f32.xlu0 %v830
  %v832 = vpop.xlane.xlu0 %831
  %v833 = vsel %vm811, %v778, 0.0
  %834 = vadd.xlane.f32.xlu0 %v833
  %v835 = vpop.xlane.xlu0 %834
  %v836 = vsel %vm811, %v780, 0.0
  %837 = vadd.xlane.f32.xlu0 %v836
  %v838 = vpop.xlane.xlu0 %837
  %v839 = vsel %vm811, %v782, 0.0
  %840 = vadd.xlane.f32.xlu0 %v839
  %v841 = vpop.xlane.xlu0 %840
  %v842 = vsel %vm811, %v784, 0.0
  %843 = vadd.xlane.f32.xlu0 %v842
  %v844 = vpop.xlane.xlu0 %843
  %v845 = vsel %vm811, %v786, 0.0
  %846 = vadd.xlane.f32.xlu0 %v845
  %v847 = vpop.xlane.xlu0 %846
  %v848 = vsel %vm811, %v788, 0.0
  %849 = vadd.xlane.f32.xlu0 %v848
  %v850 = vpop.xlane.xlu0 %849
  %v851 = vsel %vm811, %v790, 0.0
  %852 = vadd.xlane.f32.xlu0 %v851
  %v853 = vpop.xlane.xlu0 %852
  %v854 = vsel %vm811, %v792, 0.0
  %855 = vadd.xlane.f32.xlu0 %v854
  %v856 = vpop.xlane.xlu0 %855
  %v857 = vsel %vm811, %v794, 0.0
  %858 = vadd.xlane.f32.xlu0 %v857
  %v859 = vpop.xlane.xlu0 %858
  %v860 = vrcp.pop %v814
  %v861 = vrcp.pop %v817
  %v862 = vrcp.pop %v820
  %v863 = vrcp.pop %v823
  %v864 = vrcp.pop %v826
  %v865 = vrcp.pop %v829
  %v866 = vrcp.pop %v832
  %v867 = vrcp.pop %v835
  %v868 = vrcp.pop %v838
  %v869 = vrcp.pop %v841
  %v870 = vrcp.pop %v844
  %v871 = vrcp.pop %v847
  %v872 = vrcp.pop %v850
  %v873 = vrcp.pop %v853
  %v874 = vrcp.pop %v856
  %v875 = vrcp.pop %v859
  %v876 = vmul.f32 %v716, %v860
  %v877 = vmul.f32 %v718, %v861
  %v878 = vmul.f32 %v720, %v862
  %v879 = vmul.f32 %v722, %v863
  %v880 = vmul.f32 %v724, %v864
  %v881 = vmul.f32 %v726, %v865
  %v882 = vmul.f32 %v728, %v866
  %v883 = vmul.f32 %v730, %v867
  %v884 = vmul.f32 %v732, %v868
  %v885 = vmul.f32 %v734, %v869
  %v886 = vmul.f32 %v736, %v870
  %v887 = vmul.f32 %v738, %v871
  %v888 = vmul.f32 %v740, %v872
  %v889 = vmul.f32 %v742, %v873
  %v890 = vmul.f32 %v744, %v874
  %v891 = vmul.f32 %v746, %v875
  %v892 = vadd.f32 %v876, 1.0
  %v893 = vadd.f32 %v877, 1.0
  %v894 = vadd.f32 %v878, 1.0
  %v895 = vadd.f32 %v879, 1.0
  %v896 = vadd.f32 %v880, 1.0
  %v897 = vadd.f32 %v881, 1.0
  %v898 = vadd.f32 %v882, 1.0
  %v899 = vadd.f32 %v883, 1.0
  %v900 = vadd.f32 %v884, 1.0
  %v901 = vadd.f32 %v885, 1.0
  %v902 = vadd.f32 %v886, 1.0
  %v903 = vadd.f32 %v887, 1.0
  %v904 = vadd.f32 %v888, 1.0
  %v905 = vadd.f32 %v889, 1.0
  %v906 = vadd.f32 %v890, 1.0
  %v907 = vadd.f32 %v891, 1.0
  %v908 = vmul.f32 %v554, %v892
  %v909 = vmul.f32 %v555, %v893
  %v910 = vmul.f32 %v556, %v894
  %v911 = vmul.f32 %v557, %v895
  %v912 = vmul.f32 %v558, %v896
  %v913 = vmul.f32 %v559, %v897
  %v914 = vmul.f32 %v560, %v898
  %v915 = vmul.f32 %v561, %v899
  %v916 = vmul.f32 %v562, %v900
  %v917 = vmul.f32 %v563, %v901
  %v918 = vmul.f32 %v564, %v902
  %v919 = vmul.f32 %v565, %v903
  %v920 = vmul.f32 %v566, %v904
  %v921 = vmul.f32 %v567, %v905
  %v922 = vmul.f32 %v568, %v906
  %v923 = vmul.f32 %v569, %v907
  %940 = vrot.lane.b32.xlu0 %v554, 120
  %v941 = vpop.permute.xlu0 %940
  %942 = vrot.lane.b32.xlu0 %v555, 120
  %v943 = vpop.permute.xlu0 %942
  %944 = vrot.lane.b32.xlu0 %v556, 120
  %v945 = vpop.permute.xlu0 %944
  %946 = vrot.lane.b32.xlu0 %v557, 120
  %v947 = vpop.permute.xlu0 %946
  %948 = vrot.lane.b32.xlu0 %v558, 120
  %v949 = vpop.permute.xlu0 %948
  %950 = vrot.lane.b32.xlu0 %v559, 120
  %v951 = vpop.permute.xlu0 %950
  %952 = vrot.lane.b32.xlu0 %v560, 120
  %v953 = vpop.permute.xlu0 %952
  %954 = vrot.lane.b32.xlu0 %v561, 120
  %v955 = vpop.permute.xlu0 %954
  %956 = vrot.lane.b32.xlu0 %v562, 120
  %v957 = vpop.permute.xlu0 %956
  %958 = vrot.lane.b32.xlu0 %v563, 120
  %v959 = vpop.permute.xlu0 %958
  %960 = vrot.lane.b32.xlu0 %v564, 120
  %v961 = vpop.permute.xlu0 %960
  %962 = vrot.lane.b32.xlu0 %v565, 120
  %v963 = vpop.permute.xlu0 %962
  %964 = vrot.lane.b32.xlu0 %v566, 120
  %v965 = vpop.permute.xlu0 %964
  %966 = vrot.lane.b32.xlu0 %v567, 120
  %v967 = vpop.permute.xlu0 %966
  %968 = vrot.lane.b32.xlu0 %v568, 120
  %v969 = vpop.permute.xlu0 %968
  %970 = vrot.lane.b32.xlu0 %v569, 120
  %v971 = vpop.permute.xlu0 %970
  %v988 = vsub.f32 %v908, %v941
  %v989 = vsub.f32 %v909, %v943
  %v990 = vsub.f32 %v910, %v945
  %v991 = vsub.f32 %v911, %v947
  %v992 = vsub.f32 %v912, %v949
  %v993 = vsub.f32 %v913, %v951
  %v994 = vsub.f32 %v914, %v953
  %v995 = vsub.f32 %v915, %v955
  %v996 = vsub.f32 %v916, %v957
  %v997 = vsub.f32 %v917, %v959
  %v998 = vsub.f32 %v918, %v961
  %v999 = vsub.f32 %v919, %v963
  %v1000 = vsub.f32 %v920, %v965
  %v1001 = vsub.f32 %v921, %v967
  %v1002 = vsub.f32 %v922, %v969
  %v1003 = vsub.f32 %v923, %v971
  %v1004 = vsel %vm811, %v554, -inf
  %v1005 = vsel %vm811, %v555, -inf
  %v1006 = vsel %vm811, %v556, -inf
  %v1007 = vsel %vm811, %v557, -inf
  %v1008 = vsel %vm811, %v558, -inf
  %v1009 = vmax.f32 %v1004, %v1008
  %v1010 = vsel %vm811, %v559, -inf
  %v1011 = vmax.f32 %v1005, %v1010
  %v1012 = vsel %vm811, %v560, -inf
  %v1013 = vmax.f32 %v1006, %v1012
  %v1014 = vsel %vm811, %v561, -inf
  %v1015 = vmax.f32 %v1007, %v1014
  %v1016 = vmax.f32 %v1009, %v1011
  %v1017 = vmax.f32 %v1013, %v1015
  %v1018 = vmax.f32 %v1016, %v1017
  %v1019 = vrot.slane %v1018, 4
  %v1020 = vmax.f32 %v1018, %v1019
  %v1021 = vrot.slane %v1020, 2
  %v1022 = vmax.f32 %v1020, %v1021
  %v1023 = vrot.slane %v1022, 1
  %v1024 = vmax.f32 %v1022, %v1023
  %v1025 = vsub.f32 %v554, %v1024
  %v1026 = vsub.f32 %v555, %v1024
  %v1027 = vsub.f32 %v556, %v1024
  %v1028 = vsub.f32 %v557, %v1024
  %v1029 = vsub.f32 %v558, %v1024
  %v1030 = vsub.f32 %v559, %v1024
  %v1031 = vsub.f32 %v560, %v1024
  %v1032 = vsub.f32 %v561, %v1024
  %v1033 = vmul.f32 %v1025, 1.442695
  %v1034 = vpow.pop %v1033
  %v1035 = vmul.f32 %v1026, 1.442695
  %v1036 = vpow.pop %v1035
  %v1037 = vmul.f32 %v1027, 1.442695
  %v1038 = vpow.pop %v1037
  %v1039 = vmul.f32 %v1028, 1.442695
  %v1040 = vpow.pop %v1039
  %v1041 = vmul.f32 %v1029, 1.442695
  %v1042 = vpow.pop %v1041
  %v1043 = vmul.f32 %v1030, 1.442695
  %v1044 = vpow.pop %v1043
  %v1045 = vmul.f32 %v1031, 1.442695
  %v1046 = vpow.pop %v1045
  %v1047 = vmul.f32 %v1032, 1.442695
  %v1048 = vpow.pop %v1047
  %v1049 = vsel %vm811, %v1034, 0.0
  %v1050 = vsel %vm811, %v1036, 0.0
  %v1051 = vadd.f32 %v1049, %v1050
  %v1052 = vsel %vm811, %v1038, 0.0
  %v1053 = vadd.f32 %v1051, %v1052
  %v1054 = vsel %vm811, %v1040, 0.0
  %v1055 = vadd.f32 %v1053, %v1054
  %v1056 = vsel %vm811, %v1042, 0.0
  %v1057 = vadd.f32 %v1055, %v1056
  %v1058 = vsel %vm811, %v1044, 0.0
  %v1059 = vadd.f32 %v1057, %v1058
  %v1060 = vsel %vm811, %v1046, 0.0
  %v1061 = vadd.f32 %v1059, %v1060
  %v1062 = vsel %vm811, %v1048, 0.0
  %v1063 = vadd.f32 %v1061, %v1062
  %v1064 = vrot.slane %v1063, 4
  %v1065 = vadd.f32 %v1063, %v1064
  %v1066 = vrot.slane %v1065, 2
  %v1067 = vadd.f32 %v1065, %v1066
  %v1068 = vrot.slane %v1067, 1
  %v1069 = vadd.f32 %v1067, %v1068
  %v1070 = vrcp.pop %v1069
  %v1071 = vmul.f32 %v1034, %v1070
  %v1072 = vmul.f32 %v1036, %v1070
  %v1073 = vmul.f32 %v1038, %v1070
  %v1074 = vmul.f32 %v1040, %v1070
  %v1075 = vmul.f32 %v1042, %v1070
  %v1076 = vmul.f32 %v1044, %v1070
  %v1077 = vmul.f32 %v1046, %v1070
  %v1078 = vmul.f32 %v1048, %v1070
  %1087 = vrot.lane.b32.xlu0 %v1071, 8
  %v1088 = vpop.permute.xlu0 %1087
  %1089 = vrot.lane.b32.xlu0 %v1072, 8
  %v1090 = vpop.permute.xlu0 %1089
  %1091 = vrot.lane.b32.xlu0 %v1073, 8
  %v1092 = vpop.permute.xlu0 %1091
  %1093 = vrot.lane.b32.xlu0 %v1074, 8
  %v1094 = vpop.permute.xlu0 %1093
  %1095 = vrot.lane.b32.xlu0 %v1075, 8
  %v1096 = vpop.permute.xlu0 %1095
  %1097 = vrot.lane.b32.xlu0 %v1076, 8
  %v1098 = vpop.permute.xlu0 %1097
  %1099 = vrot.lane.b32.xlu0 %v1077, 8
  %v1100 = vpop.permute.xlu0 %1099
  %1101 = vrot.lane.b32.xlu0 %v1078, 8
  %v1102 = vpop.permute.xlu0 %1101
  %v1111 = vmul.f32 %v988, %v1088
  %v1112 = vmul.f32 %v989, %v1090
  %v1113 = vmul.f32 %v990, %v1092
  %v1114 = vmul.f32 %v991, %v1094
  %v1115 = vmul.f32 %v992, %v1096
  %v1116 = vmul.f32 %v993, %v1098
  %v1117 = vmul.f32 %v994, %v1100
  %v1118 = vmul.f32 %v995, %v1102
  %v1119 = vsel %vm570, %v1111, 0.0
  %v1120 = vsel %vm570, %v1112, 0.0
  %v1121 = vadd.f32 %v1119, %v1120
  %v1122 = vsel %vm570, %v1113, 0.0
  %v1123 = vadd.f32 %v1121, %v1122
  %v1124 = vsel %vm570, %v1114, 0.0
  %v1125 = vadd.f32 %v1123, %v1124
  %v1126 = vsel %vm570, %v1115, 0.0
  %v1127 = vadd.f32 %v1125, %v1126
  %v1128 = vsel %vm570, %v1116, 0.0
  %v1129 = vadd.f32 %v1127, %v1128
  %v1130 = vsel %vm570, %v1117, 0.0
  %v1131 = vadd.f32 %v1129, %v1130
  %v1132 = vsel %vm570, %v1118, 0.0
  %v1133 = vadd.f32 %v1131, %v1132
  %v1134 = vrot.slane %v1133, 4
  %v1135 = vadd.f32 %v1133, %v1134
  %v1136 = vrot.slane %v1135, 2
  %v1137 = vadd.f32 %v1135, %v1136
  %v1138 = vrot.slane %v1137, 1
  %v1139 = vadd.f32 %v1137, %v1138
  %v1140 = vsel %vm811, %v562, -inf
  %v1141 = vsel %vm811, %v563, -inf
  %v1142 = vsel %vm811, %v564, -inf
  %v1143 = vsel %vm811, %v565, -inf
  %v1144 = vsel %vm811, %v566, -inf
  %v1145 = vmax.f32 %v1140, %v1144
  %v1146 = vsel %vm811, %v567, -inf
  %v1147 = vmax.f32 %v1141, %v1146
  %v1148 = vsel %vm811, %v568, -inf
  %v1149 = vmax.f32 %v1142, %v1148
  %v1150 = vsel %vm811, %v569, -inf
  %v1151 = vmax.f32 %v1143, %v1150
  %v1152 = vmax.f32 %v1145, %v1147
  %v1153 = vmax.f32 %v1149, %v1151
  %v1154 = vmax.f32 %v1152, %v1153
  %v1155 = vrot.slane %v1154, 4
  %v1156 = vmax.f32 %v1154, %v1155
  %v1157 = vrot.slane %v1156, 2
  %v1158 = vmax.f32 %v1156, %v1157
  %v1159 = vrot.slane %v1158, 1
  %v1160 = vmax.f32 %v1158, %v1159
  %v1161 = vsub.f32 %v562, %v1160
  %v1162 = vsub.f32 %v563, %v1160
  %v1163 = vsub.f32 %v564, %v1160
  %v1164 = vsub.f32 %v565, %v1160
  %v1165 = vsub.f32 %v566, %v1160
  %v1166 = vsub.f32 %v567, %v1160
  %v1167 = vsub.f32 %v568, %v1160
  %v1168 = vsub.f32 %v569, %v1160
  %v1169 = vmul.f32 %v1161, 1.442695
  %v1170 = vpow.pop %v1169
  %v1171 = vmul.f32 %v1162, 1.442695
  %v1172 = vpow.pop %v1171
  %v1173 = vmul.f32 %v1163, 1.442695
  %v1174 = vpow.pop %v1173
  %v1175 = vmul.f32 %v1164, 1.442695
  %v1176 = vpow.pop %v1175
  %v1177 = vmul.f32 %v1165, 1.442695
  %v1178 = vpow.pop %v1177
  %v1179 = vmul.f32 %v1166, 1.442695
  %v1180 = vpow.pop %v1179
  %v1181 = vmul.f32 %v1167, 1.442695
  %v1182 = vpow.pop %v1181
  %v1183 = vmul.f32 %v1168, 1.442695
  %v1184 = vpow.pop %v1183
  %v1185 = vsel %vm811, %v1170, 0.0
  %v1186 = vsel %vm811, %v1172, 0.0
  %v1187 = vadd.f32 %v1185, %v1186
  %v1188 = vsel %vm811, %v1174, 0.0
  %v1189 = vadd.f32 %v1187, %v1188
  %v1190 = vsel %vm811, %v1176, 0.0
  %v1191 = vadd.f32 %v1189, %v1190
  %v1192 = vsel %vm811, %v1178, 0.0
  %v1193 = vadd.f32 %v1191, %v1192
  %v1194 = vsel %vm811, %v1180, 0.0
  %v1195 = vadd.f32 %v1193, %v1194
  %v1196 = vsel %vm811, %v1182, 0.0
  %v1197 = vadd.f32 %v1195, %v1196
  %v1198 = vsel %vm811, %v1184, 0.0
  %v1199 = vadd.f32 %v1197, %v1198
  %v1200 = vrot.slane %v1199, 4
  %v1201 = vadd.f32 %v1199, %v1200
  %v1202 = vrot.slane %v1201, 2
  %v1203 = vadd.f32 %v1201, %v1202
  %v1204 = vrot.slane %v1203, 1
  %v1205 = vadd.f32 %v1203, %v1204
  %v1206 = vrcp.pop %v1205
  %v1207 = vmul.f32 %v1170, %v1206
  %v1208 = vmul.f32 %v1172, %v1206
  %v1209 = vmul.f32 %v1174, %v1206
  %v1210 = vmul.f32 %v1176, %v1206
  %v1211 = vmul.f32 %v1178, %v1206
  %v1212 = vmul.f32 %v1180, %v1206
  %v1213 = vmul.f32 %v1182, %v1206
  %v1214 = vmul.f32 %v1184, %v1206
  %1223 = vrot.lane.b32.xlu0 %v1207, 8
  %v1224 = vpop.permute.xlu0 %1223
  %1225 = vrot.lane.b32.xlu0 %v1208, 8
  %v1226 = vpop.permute.xlu0 %1225
  %1227 = vrot.lane.b32.xlu0 %v1209, 8
  %v1228 = vpop.permute.xlu0 %1227
  %1229 = vrot.lane.b32.xlu0 %v1210, 8
  %v1230 = vpop.permute.xlu0 %1229
  %1231 = vrot.lane.b32.xlu0 %v1211, 8
  %v1232 = vpop.permute.xlu0 %1231
  %1233 = vrot.lane.b32.xlu0 %v1212, 8
  %v1234 = vpop.permute.xlu0 %1233
  %1235 = vrot.lane.b32.xlu0 %v1213, 8
  %v1236 = vpop.permute.xlu0 %1235
  %1237 = vrot.lane.b32.xlu0 %v1214, 8
  %v1238 = vpop.permute.xlu0 %1237
  %v1247 = vmul.f32 %v996, %v1224
  %v1248 = vmul.f32 %v997, %v1226
  %v1249 = vmul.f32 %v998, %v1228
  %v1250 = vmul.f32 %v999, %v1230
  %v1251 = vmul.f32 %v1000, %v1232
  %v1252 = vmul.f32 %v1001, %v1234
  %v1253 = vmul.f32 %v1002, %v1236
  %v1254 = vmul.f32 %v1003, %v1238
  %v1255 = vsel %vm570, %v1247, 0.0
  %v1256 = vsel %vm570, %v1248, 0.0
  %v1257 = vadd.f32 %v1255, %v1256
  %v1258 = vsel %vm570, %v1249, 0.0
  %v1259 = vadd.f32 %v1257, %v1258
  %v1260 = vsel %vm570, %v1250, 0.0
  %v1261 = vadd.f32 %v1259, %v1260
  %v1262 = vsel %vm570, %v1251, 0.0
  %v1263 = vadd.f32 %v1261, %v1262
  %v1264 = vsel %vm570, %v1252, 0.0
  %v1265 = vadd.f32 %v1263, %v1264
  %v1266 = vsel %vm570, %v1253, 0.0
  %v1267 = vadd.f32 %v1265, %v1266
  %v1268 = vsel %vm570, %v1254, 0.0
  %v1269 = vadd.f32 %v1267, %v1268
  %v1270 = vrot.slane %v1269, 4
  %v1271 = vadd.f32 %v1269, %v1270
  %v1272 = vrot.slane %v1271, 2
  %v1273 = vadd.f32 %v1271, %v1272
  %v1274 = vrot.slane %v1273, 1
  %v1275 = vadd.f32 %v1273, %v1274
  %vm1276 = vcmask 1040384
  %v1277 = vsel %vm1276, %v1139, %v1275
  %v1278 = vmul.f32 %v549, 20.085537
  %1280 = vrot.lane.b32.xlu0 %v1278, 120
  %v1281 = vpop.permute.xlu0 %1280
  %v1283 = vsub.f32 %v1278, %v1281
  %v1285 = vrot.slane %v1283, 6
  %v1287 = vsel %vm338, %v1277, %v1285
  %1289 = vrot.lane.b32.xlu0 %v1287, 120
  %v1290 = vpop.permute.xlu0 %1289
  %v1292 = vsel %vm811, %v1290, 0.0
  %1293 = vst [vmem:[%s5] sm:$0xf] %v1292
  // Predicated region
  $region22: #{denseclip_forward.1} parent=0 // pred_check
    _
  $region23: #{denseclip_forward.1} parent=0 // pred_check_branch
    %1295 = sbr.rel (0) target = $region25
  $region24: #{denseclip_forward.1} parent=0 // pred_region
    _
  $region25: #{denseclip_forward.1} parent=0 // pred_fallthru
    _
  // Predicated region
  $region26: #{denseclip_forward.1} parent=0 // pred_check
    _
  $region27: #{denseclip_forward.1} parent=0 // pred_check_branch
    %1297 = sbr.rel (0) target = $region29
  $region28: #{denseclip_forward.1} parent=0 // pred_region
    _
  $region29: #{denseclip_forward.1} parent=0 // pred_fallthru
    _
  // Predicated region
  $region30: #{denseclip_forward.1} parent=0 // pred_check
    _
  $region31: #{denseclip_forward.1} parent=0 // pred_check_branch
    %1299 = sbr.rel (0) target = $region33
  $region32: #{denseclip_forward.1} parent=0 // pred_region
    _
  $region33: #{denseclip_forward.1} parent=0 // pred_fallthru
    _
  // Predicated region
  $region34: #{denseclip_forward.1} parent=0 // pred_check
    _
  $region35: #{denseclip_forward.1} parent=0 // pred_check_branch
    %1301 = sbr.rel (0) target = $region37
  $region36: #{denseclip_forward.1} parent=0 // pred_region
    _
  $region37: #{denseclip_forward.1} parent=0 // pred_fallthru
    _

</llo_original>
